<compile_context>
chip_gen: v6e
topology: v6e:2x2x1
jax: 0.10.0
libtpu: 0.0.40
codegen_flags: <defaults>
</compile_context>

<pallas_src>
import functools

import jax
import jax.numpy as jnp
from jax.experimental import pallas as pl
from jax.experimental.pallas import tpu as pltpu


D_IN = 28 * 28          # flattened MNIST image
HIDDEN = 32             # logical hidden width of the base MLP
N_CLASSES = 10          # logical number of classes
H_PAD = 128             # hidden padded to a full lane width
C_PAD = 128             # classes padded to a full lane width
TILE_B_MAX = 512        # multiple of 128 and 256 -> clean MXU M-tiles on all gens


def _round_up(x, m):
    return ((x + m - 1) // m) * m


def _mlp_kernel(x_ref, w1_ref, b1_ref, w2_ref, b2_ref, o_ref):
    # x:  (TILE_B, D_IN)   bf16   (streamed per grid step)
    # w1: (D_IN, H_PAD)    bf16   (resident)
    # b1: (1, H_PAD)       f32    (resident)
    # w2: (H_PAD, C_PAD)   bf16   (resident)
    # b2: (1, C_PAD)       f32    (resident)
    # o:  (TILE_B, C_PAD)  f32    (lane-dense writeback)
    h = jnp.dot(x_ref[...], w1_ref[...], preferred_element_type=jnp.float32)
    h = jnp.maximum(h + b1_ref[...], 0.0)                 # f32 epilogue (VPU)
    logits = jnp.dot(h.astype(w2_ref.dtype), w2_ref[...],
                     preferred_element_type=jnp.float32)
    o_ref[...] = logits + b2_ref[...]


@functools.partial(jax.jit, static_argnames=())
def mlp_forward_pallas(x_flat_bf16, w1, b1, w2, b2):
    """x_flat_bf16: (B, D_IN) bf16; returns padded logits (B, C_PAD) f32."""
    B, d_in = x_flat_bf16.shape
    h_pad = w1.shape[1]
    c_pad = w2.shape[1]

    # Batch tile: multiple of 8 (sublane constraint), capped at TILE_B_MAX.
    tile_b = min(TILE_B_MAX, _round_up(B, 8))
    b_pad = _round_up(B, tile_b)
    if b_pad != B:
        x_flat_bf16 = jnp.pad(x_flat_bf16, ((0, b_pad - B), (0, 0)))
    grid = (b_pad // tile_b,)

    cost = pl.CostEstimate(
        flops=2 * b_pad * (d_in * h_pad + h_pad * c_pad),
        transcendentals=0,
        bytes_accessed=(b_pad * d_in * 2            # x (bf16)
                        + d_in * h_pad * 2          # w1 (bf16)
                        + h_pad * c_pad * 2         # w2 (bf16)
                        + (h_pad + c_pad) * 4       # biases (f32)
                        + b_pad * c_pad * 4),       # logits out (f32)
    )

    out_padded = pl.pallas_call(
        _mlp_kernel,
        out_shape=jax.ShapeDtypeStruct((b_pad, c_pad), jnp.float32),
        grid_spec=pltpu.PrefetchScalarGridSpec(
            num_scalar_prefetch=0,
            grid=grid,
            in_specs=[
                pl.BlockSpec((tile_b, d_in), lambda i: (i, 0)),   # x: streamed
                pl.BlockSpec((d_in, h_pad), lambda i: (0, 0)),    # w1: resident
                pl.BlockSpec((1, h_pad), lambda i: (0, 0)),       # b1: resident
                pl.BlockSpec((h_pad, c_pad), lambda i: (0, 0)),   # w2: resident
                pl.BlockSpec((1, c_pad), lambda i: (0, 0)),       # b2: resident
            ],
            out_specs=pl.BlockSpec((tile_b, c_pad), lambda i: (i, 0)),
        ),
        compiler_params=pltpu.CompilerParams(
            dimension_semantics=("parallel",),   # v7x: shard batch tiles over 2 TCs
        ),
        cost_estimate=cost,
    )(x_flat_bf16, w1, b1, w2, b2)
    return out_padded[:B]


class BaseMLP:
    """Synthetic stand-in for NaiveWrapper's `base` net (MLP classifier).

    Weights stored pre-padded to lane-dense shapes (H_PAD / C_PAD) in bf16;
    the zero padding does not change the logits in the first N_CLASSES columns.
    """

    def __init__(self, in_dim, hidden, n_classes, key):
        k1, k2 = jax.random.split(key)
        w1 = (jax.random.normal(k1, (in_dim, hidden), jnp.float32)
              * (1.0 / jnp.sqrt(in_dim)))
        w2 = (jax.random.normal(k2, (hidden, n_classes), jnp.float32)
              * (1.0 / jnp.sqrt(hidden)))
        self.n_classes = n_classes
        # zero-pad hidden -> H_PAD, classes -> C_PAD; cast weights to bf16.
        self.w1 = jnp.pad(w1, ((0, 0), (0, H_PAD - hidden))).astype(jnp.bfloat16)
        self.b1 = jnp.zeros((1, H_PAD), jnp.float32)
        self.w2 = jnp.pad(w2, ((0, H_PAD - hidden), (0, C_PAD - n_classes))
                          ).astype(jnp.bfloat16)
        self.b2 = jnp.zeros((1, C_PAD), jnp.float32)

    def __call__(self, x, *args, **kwargs):
        # Glue (flatten + bf16 cast) stays in plain JAX; hot path is the kernel.
        # Note: at tiny batches (B<=8) this is pure launch overhead; the tiling
        # pays off at realistic batch sizes.
        x_flat = x.reshape(x.shape[0], -1).astype(jnp.bfloat16)
        logits_padded = mlp_forward_pallas(
            x_flat, self.w1, self.b1, self.w2, self.b2)
        return logits_padded[:, :self.n_classes]


class NaiveWrapper:
    """forward(*args, **kwargs) -> self.net(*args, **kwargs) (exact semantics).

    observe() / optimizer stepping / initialize_word_emb are training-loop
    machinery, not part of the forward pass, and are omitted here.
    """

    def __init__(self, base, optimizer=None, input_size=None, cfg=None,
                 goal="split_mnist", **kwargs):
        self.net = base
        self.optimizer = optimizer
        self.input_size = input_size
        self.cfg = cfg
        self.goal = goal
        self.rev_optim = None  # TODO(synk): rev_update_modules Adam optimizer state has no forward-pass Pallas equivalent.

    def forward(self, *args, **kwargs):
        return self.net(*args, **kwargs)

    __call__ = forward


if __name__ == "__main__":
    key = jax.random.PRNGKey(0)
    k_x, k_net = jax.random.split(key)

    # Small MNIST-like input, NCHW as in PyTorch: (batch=2, channels=1, 28, 28)
    B, C_in, H, W = 2, 1, 28, 28
    x = jax.random.normal(k_x, (B, C_in, H, W), jnp.float32)

    base = BaseMLP(in_dim=C_in * H * W, hidden=HIDDEN, n_classes=N_CLASSES,
                   key=k_net)
    wrapper = NaiveWrapper(base, goal="split_mnist")

    logits = wrapper(x)
    jax.block_until_ready(logits)

    # sanity: plain-JAX reference using the same bf16-rounded operands
    x_flat = x.reshape(B, -1).astype(jnp.bfloat16).astype(jnp.float32)
    w1f = base.w1.astype(jnp.float32)
    w2f = base.w2.astype(jnp.float32)
    h_ref = jnp.maximum(x_flat @ w1f + base.b1, 0.0)
    ref = (h_ref.astype(jnp.bfloat16).astype(jnp.float32) @ w2f
           + base.b2)[:, :N_CLASSES]

    assert logits.shape == (B, N_CLASSES)
    assert jnp.allclose(logits, ref, atol=2e-2, rtol=2e-2), (
        jnp.max(jnp.abs(logits - ref)))

    print("KERNEL_OK")
</pallas_src>

<mosaic_0001>
module attributes {stable_mosaic.version = 11 : i64} {
  func.func @_mlp_kernel(%arg0: i32, %arg1: memref<8x784xbf16, #tpu.memory_space<vmem>>, %arg2: memref<784x128xbf16, #tpu.memory_space<vmem>>, %arg3: memref<1x128xf32, #tpu.memory_space<vmem>>, %arg4: memref<128x128xbf16, #tpu.memory_space<vmem>>, %arg5: memref<1x128xf32, #tpu.memory_space<vmem>>, %arg6: memref<8x128xf32, #tpu.memory_space<vmem>>) attributes {dimension_semantics = [#tpu.dimension_semantics<parallel>], iteration_bounds = array<i64: 1>, scalar_prefetch = 0 : i64, scratch_operands = 0 : i64, tpu.core_type = #tpu.core_type<tc>, window_params = [{transform_indices = @transform_0, window_bounds = array<i64: 8, 784>}, {pipeline_mode = #tpu.pipeline_mode<synchronous>, transform_indices = @transform_1, window_bounds = array<i64: 784, 128>}, {pipeline_mode = #tpu.pipeline_mode<synchronous>, transform_indices = @transform_2, window_bounds = array<i64: 1, 128>}, {pipeline_mode = #tpu.pipeline_mode<synchronous>, transform_indices = @transform_3, window_bounds = array<i64: 128, 128>}, {pipeline_mode = #tpu.pipeline_mode<synchronous>, transform_indices = @transform_4, window_bounds = array<i64: 1, 128>}, {transform_indices = @transform_5, window_bounds = array<i64: 8, 128>}]} {
    %c0 = arith.constant 0 : index
    %c0_0 = arith.constant 0 : index
    %0 = vector.load %arg1[%c0, %c0_0] : memref<8x784xbf16, #tpu.memory_space<vmem>>, vector<8x784xbf16>
    %c0_1 = arith.constant 0 : index
    %c0_2 = arith.constant 0 : index
    %1 = vector.load %arg2[%c0_1, %c0_2] : memref<784x128xbf16, #tpu.memory_space<vmem>>, vector<784x128xbf16>
    %cst = arith.constant dense<0.000000e+00> : vector<8x128xf32>
    %2 = tpu.matmul %0, %1, %cst {dimension_numbers = #tpu.dot_dimension_numbers<[1], [0], [0], [1], [0, 0, 1, 1], [], []>} : vector<8x784xbf16>, vector<784x128xbf16>, vector<8x128xf32> -> vector<8x128xf32>
    %c0_3 = arith.constant 0 : index
    %c0_4 = arith.constant 0 : index
    %3 = vector.load %arg3[%c0_3, %c0_4] : memref<1x128xf32, #tpu.memory_space<vmem>>, vector<1x128xf32>
    %4 = vector.broadcast %3 : vector<1x128xf32> to vector<8x128xf32>
    %5 = arith.addf %2, %4 : vector<8x128xf32>
    %cst_5 = arith.constant 0.000000e+00 : f32
    %6 = vector.broadcast %cst_5 : f32 to vector<8x128xf32>
    %7 = arith.maximumf %5, %6 : vector<8x128xf32>
    %8 = arith.truncf %7 : vector<8x128xf32> to vector<8x128xbf16>
    %c0_6 = arith.constant 0 : index
    %c0_7 = arith.constant 0 : index
    %9 = vector.load %arg4[%c0_6, %c0_7] : memref<128x128xbf16, #tpu.memory_space<vmem>>, vector<128x128xbf16>
    %cst_8 = arith.constant dense<0.000000e+00> : vector<8x128xf32>
    %10 = tpu.matmul %8, %9, %cst_8 {dimension_numbers = #tpu.dot_dimension_numbers<[1], [0], [0], [1], [0, 0, 1, 1], [], []>} : vector<8x128xbf16>, vector<128x128xbf16>, vector<8x128xf32> -> vector<8x128xf32>
    %c0_9 = arith.constant 0 : index
    %c0_10 = arith.constant 0 : index
    %11 = vector.load %arg5[%c0_9, %c0_10] : memref<1x128xf32, #tpu.memory_space<vmem>>, vector<1x128xf32>
    %12 = vector.broadcast %11 : vector<1x128xf32> to vector<8x128xf32>
    %13 = arith.addf %10, %12 : vector<8x128xf32>
    %c0_11 = arith.constant 0 : index
    %c0_12 = arith.constant 0 : index
    %14 = vector.load %arg6[%c0_11, %c0_12] : memref<8x128xf32, #tpu.memory_space<vmem>>, vector<8x128xf32>
    tpu.vector_store %arg6[%c0_11, %c0_12], %13 {strides = array<i32>} : memref<8x128xf32, #tpu.memory_space<vmem>>, vector<8x128xf32>,
    return
  }
  func.func @transform_0(%arg0: i32) -> (i32, i32) {
    %c0_i32 = arith.constant 0 : i32
    %c0_i32_0 = arith.constant 0 : i32
    return %arg0, %c0_i32 : i32, i32
  }
  func.func @transform_1(%arg0: i32) -> (i32, i32) {
    %c0_i32 = arith.constant 0 : i32
    %c0_i32_0 = arith.constant 0 : i32
    %c0_i32_1 = arith.constant 0 : i32
    return %c0_i32, %c0_i32_0 : i32, i32
  }
  func.func @transform_2(%arg0: i32) -> (i32, i32) {
    %c0_i32 = arith.constant 0 : i32
    %c0_i32_0 = arith.constant 0 : i32
    %c0_i32_1 = arith.constant 0 : i32
    return %c0_i32, %c0_i32_0 : i32, i32
  }
  func.func @transform_3(%arg0: i32) -> (i32, i32) {
    %c0_i32 = arith.constant 0 : i32
    %c0_i32_0 = arith.constant 0 : i32
    %c0_i32_1 = arith.constant 0 : i32
    return %c0_i32, %c0_i32_0 : i32, i32
  }
  func.func @transform_4(%arg0: i32) -> (i32, i32) {
    %c0_i32 = arith.constant 0 : i32
    %c0_i32_0 = arith.constant 0 : i32
    %c0_i32_1 = arith.constant 0 : i32
    return %c0_i32, %c0_i32_0 : i32, i32
  }
  func.func @transform_5(%arg0: i32) -> (i32, i32) {
    %c0_i32 = arith.constant 0 : i32
    %c0_i32_0 = arith.constant 0 : i32
    return %arg0, %c0_i32 : i32, i32
  }
}

</mosaic_0001>

<llo_original>
// kernel: mlp_forward_pallas.1
$region0: #{mlp_forward_pallas.1}
  #allocation0 [shape = 'u32[]', space=smem, size = 0x4, offset = 0x4, fixed_abs, tag = 'smem constant byte address 0x4 - core index']
  #allocation1 [shape = 'u32[144,128]{1,0:T(1,128)}', space=vmem, size = 0x12000, scoped, tag = 'internal scratch']
  %s0 = inlined_call_operand.vmem [shape: bf16[8,784], index: 0, kind: input, shape index: {}]
  %s1 = inlined_call_operand.hbm [shape: bf16[784,128], index: 1, kind: input, shape index: {}]
  %s2 = inlined_call_operand.vmem [shape: f32[1,128], index: 2, kind: input, shape index: {}]
  %s3 = inlined_call_operand.hbm [shape: bf16[128,128], index: 3, kind: input, shape index: {}]
  %s4 = inlined_call_operand.vmem [shape: f32[1,128], index: 4, kind: input, shape index: {}]
  %s5 = inlined_call_operand.vmem [shape: f32[8,128], index: 5, kind: output, shape index: {}]
  %s6 = sld [smem:[#allocation0]]
  $region38: #{mlp_forward_pallas.1} parent=0
    _
  %s8 = ssub.s32 1, %s6
  %s9 = scalar_select 0, %s8, %s6
  $region1: #{mlp_forward_pallas.1} parent=0
    #allocation2 [shape = 'u8[200704]{0}', space=vmem, size = 0x31000, scoped, tag = 'input window, operand 1, single buffered']
    #allocation3 [shape = 's32[1]{0}', space=sflag, size = 0x4, scoped, tag = 'scoped memory for mlp_forward_pallas.1']
    #allocation4 [shape = 'u8[32768]{0}', space=vmem, size = 0x8000, scoped, tag = 'input window, operand 3, single buffered']
    #allocation5 [shape = 's32[1]{0}', space=sflag, size = 0x4, scoped, tag = 'scoped memory for mlp_forward_pallas.1']
    %10 = vsyncpa [#allocation3], 0
    %11 = vsyncpa [#allocation5], 0
    // Predicated region
    $region2: #{mlp_forward_pallas.1} parent=1 // pred_check
      _
    $region3: #{mlp_forward_pallas.1} parent=1 // pred_check_branch
      %13 = sbr.rel (0) target = $region5
    $region4: #{mlp_forward_pallas.1} parent=1 // pred_region
      _
    $region5: #{mlp_forward_pallas.1} parent=1 // pred_fallthru
      _
    // Predicated region
    $region6: #{mlp_forward_pallas.1} parent=1 // pred_check
      _
    $region7: #{mlp_forward_pallas.1} parent=1 // pred_check_branch
      %15 = sbr.rel (0) target = $region9
    $region8: #{mlp_forward_pallas.1} parent=1 // pred_region
      %s17 = ssub.s32 6272, 6272
      %18 = vsyncadd [#allocation3], %s17
      %s19 = sshll.u32 [#allocation2], 4
      %s20 = int_to_ptr.vmem [resolvable:$true] %s19
      %25 = dma.hbm_to_vmem [thread:$0]  %s1, 6272, %s20, [#allocation3], 64, 64, 4
    $region9: #{mlp_forward_pallas.1} parent=1 // pred_fallthru
      _
    // Predicated region
    $region10: #{mlp_forward_pallas.1} parent=1 // pred_check
      _
    $region11: #{mlp_forward_pallas.1} parent=1 // pred_check_branch
      %27 = sbr.rel (0) target = $region13
    $region12: #{mlp_forward_pallas.1} parent=1 // pred_region
      _
    $region13: #{mlp_forward_pallas.1} parent=1 // pred_fallthru
      _
    // Predicated region
    $region14: #{mlp_forward_pallas.1} parent=1 // pred_check
      _
    $region15: #{mlp_forward_pallas.1} parent=1 // pred_check_branch
      %29 = sbr.rel (0) target = $region17
    $region16: #{mlp_forward_pallas.1} parent=1 // pred_region
      %s31 = ssub.s32 1024, 1024
      %32 = vsyncadd [#allocation5], %s31
      %s33 = sshll.u32 [#allocation4], 4
      %s34 = int_to_ptr.vmem [resolvable:$true] %s33
      %39 = dma.hbm_to_vmem [thread:$0]  %s3, 1024, %s34, [#allocation5], 64, 64, 4
    $region17: #{mlp_forward_pallas.1} parent=1 // pred_fallthru
      _
    // Predicated region
    $region18: #{mlp_forward_pallas.1} parent=1 // pred_check
      _
    $region19: #{mlp_forward_pallas.1} parent=1 // pred_check_branch
      %41 = sbr.rel (0) target = $region21
    $region20: #{mlp_forward_pallas.1} parent=1 // pred_region
      _
    $region21: #{mlp_forward_pallas.1} parent=1 // pred_fallthru
      _
    // Predicated region
    $region22: #{mlp_forward_pallas.1} parent=1 // pred_check
      _
    $region23: #{mlp_forward_pallas.1} parent=1 // pred_check_branch
      %43 = sbr.rel (0) target = $region25
    $region24: #{mlp_forward_pallas.1} parent=1 // pred_region
      %44 = dma.done [#allocation3], 6272
    $region25: #{mlp_forward_pallas.1} parent=1 // pred_fallthru
      _
    // Predicated region
    $region26: #{mlp_forward_pallas.1} parent=1 // pred_check
      _
    $region27: #{mlp_forward_pallas.1} parent=1 // pred_check_branch
      %46 = sbr.rel (0) target = $region29
    $region28: #{mlp_forward_pallas.1} parent=1 // pred_region
      %47 = dma.done [#allocation5], 1024
    $region29: #{mlp_forward_pallas.1} parent=1 // pred_fallthru
      _
    %v49 = vld [vmem:[%s0] sm:$0xff]
    %v50 = vld [vmem:[%s0 + $0x8] sm:$0xff]
    %v51 = vld [vmem:[%s0 + $0x10] sm:$0xff]
    %v52 = vld [vmem:[%s0 + $0x18] sm:$0xf]
    %v53 = vld [vmem:[#allocation2] sm:$0xf]
    %v54 = vld [vmem:[#allocation2 + $0x4] sm:$0xf]
    %v55 = vld [vmem:[#allocation2 + $0x8] sm:$0xf]
    %v56 = vld [vmem:[#allocation2 + $0xc] sm:$0xf]
    %v57 = vld [vmem:[#allocation2 + $0x10] sm:$0xf]
    %v58 = vld [vmem:[#allocation2 + $0x14] sm:$0xf]
    %v59 = vld [vmem:[#allocation2 + $0x18] sm:$0xf]
    %v60 = vld [vmem:[#allocation2 + $0x1c] sm:$0xf]
    %v61 = vld [vmem:[#allocation2 + $0x20] sm:$0xf]
    %v62 = vld [vmem:[#allocation2 + $0x24] sm:$0xf]
    %v63 = vld [vmem:[#allocation2 + $0x28] sm:$0xf]
    %v64 = vld [vmem:[#allocation2 + $0x2c] sm:$0xf]
    %v65 = vld [vmem:[#allocation2 + $0x30] sm:$0xf]
    %v66 = vld [vmem:[#allocation2 + $0x34] sm:$0xf]
    %v67 = vld [vmem:[#allocation2 + $0x38] sm:$0xf]
    %v68 = vld [vmem:[#allocation2 + $0x3c] sm:$0xf]
    %v69 = vld [vmem:[#allocation2 + $0x40] sm:$0xf]
    %v70 = vld [vmem:[#allocation2 + $0x44] sm:$0xf]
    %v71 = vld [vmem:[#allocation2 + $0x48] sm:$0xf]
    %v72 = vld [vmem:[#allocation2 + $0x4c] sm:$0xf]
    %v73 = vld [vmem:[#allocation2 + $0x50] sm:$0xf]
    %v74 = vld [vmem:[#allocation2 + $0x54] sm:$0xf]
    %v75 = vld [vmem:[#allocation2 + $0x58] sm:$0xf]
    %v76 = vld [vmem:[#allocation2 + $0x5c] sm:$0xf]
    %v77 = vld [vmem:[#allocation2 + $0x60] sm:$0xf]
    %v78 = vld [vmem:[#allocation2 + $0x64] sm:$0xf]
    %v79 = vld [vmem:[#allocation2 + $0x68] sm:$0xf]
    %v80 = vld [vmem:[#allocation2 + $0x6c] sm:$0xf]
    %v81 = vld [vmem:[#allocation2 + $0x70] sm:$0xf]
    %v82 = vld [vmem:[#allocation2 + $0x74] sm:$0xf]
    %v83 = vld [vmem:[#allocation2 + $0x78] sm:$0xf]
    %v84 = vld [vmem:[#allocation2 + $0x7c] sm:$0xf]
    %v85 = vld [vmem:[#allocation2 + $0x80] sm:$0xf]
    %v86 = vld [vmem:[#allocation2 + $0x84] sm:$0xf]
    %v87 = vld [vmem:[#allocation2 + $0x88] sm:$0xf]
    %v88 = vld [vmem:[#allocation2 + $0x8c] sm:$0xf]
    %v89 = vld [vmem:[#allocation2 + $0x90] sm:$0xf]
    %v90 = vld [vmem:[#allocation2 + $0x94] sm:$0xf]
    %v91 = vld [vmem:[#allocation2 + $0x98] sm:$0xf]
    %v92 = vld [vmem:[#allocation2 + $0x9c] sm:$0xf]
    %v93 = vld [vmem:[#allocation2 + $0xa0] sm:$0xf]
    %v94 = vld [vmem:[#allocation2 + $0xa4] sm:$0xf]
    %v95 = vld [vmem:[#allocation2 + $0xa8] sm:$0xf]
    %v96 = vld [vmem:[#allocation2 + $0xac] sm:$0xf]
    %v97 = vld [vmem:[#allocation2 + $0xb0] sm:$0xf]
    %v98 = vld [vmem:[#allocation2 + $0xb4] sm:$0xf]
    %v99 = vld [vmem:[#allocation2 + $0xb8] sm:$0xf]
    %v100 = vld [vmem:[#allocation2 + $0xbc] sm:$0xf]
    %v101 = vld [vmem:[#allocation2 + $0xc0] sm:$0xf]
    %v102 = vld [vmem:[#allocation2 + $0xc4] sm:$0xf]
    %v103 = vld [vmem:[#allocation2 + $0xc8] sm:$0xf]
    %v104 = vld [vmem:[#allocation2 + $0xcc] sm:$0xf]
    %v105 = vld [vmem:[#allocation2 + $0xd0] sm:$0xf]
    %v106 = vld [vmem:[#allocation2 + $0xd4] sm:$0xf]
    %v107 = vld [vmem:[#allocation2 + $0xd8] sm:$0xf]
    %v108 = vld [vmem:[#allocation2 + $0xdc] sm:$0xf]
    %v109 = vld [vmem:[#allocation2 + $0xe0] sm:$0xf]
    %v110 = vld [vmem:[#allocation2 + $0xe4] sm:$0xf]
    %v111 = vld [vmem:[#allocation2 + $0xe8] sm:$0xf]
    %v112 = vld [vmem:[#allocation2 + $0xec] sm:$0xf]
    %v113 = vld [vmem:[#allocation2 + $0xf0] sm:$0xf]
    %v114 = vld [vmem:[#allocation2 + $0xf4] sm:$0xf]
    %v115 = vld [vmem:[#allocation2 + $0xf8] sm:$0xf]
    %v116 = vld [vmem:[#allocation2 + $0xfc] sm:$0xf]
    %v117 = vld [vmem:[#allocation2 + $0x100] sm:$0xf]
    %v118 = vld [vmem:[#allocation2 + $0x104] sm:$0xf]
    %v119 = vld [vmem:[#allocation2 + $0x108] sm:$0xf]
    %v120 = vld [vmem:[#allocation2 + $0x10c] sm:$0xf]
    %v121 = vld [vmem:[#allocation2 + $0x110] sm:$0xf]
    %v122 = vld [vmem:[#allocation2 + $0x114] sm:$0xf]
    %v123 = vld [vmem:[#allocation2 + $0x118] sm:$0xf]
    %v124 = vld [vmem:[#allocation2 + $0x11c] sm:$0xf]
    %v125 = vld [vmem:[#allocation2 + $0x120] sm:$0xf]
    %v126 = vld [vmem:[#allocation2 + $0x124] sm:$0xf]
    %v127 = vld [vmem:[#allocation2 + $0x128] sm:$0xf]
    %v128 = vld [vmem:[#allocation2 + $0x12c] sm:$0xf]
    %v129 = vld [vmem:[#allocation2 + $0x130] sm:$0xf]
    %v130 = vld [vmem:[#allocation2 + $0x134] sm:$0xf]
    %v131 = vld [vmem:[#allocation2 + $0x138] sm:$0xf]
    %v132 = vld [vmem:[#allocation2 + $0x13c] sm:$0xf]
    %v133 = vld [vmem:[#allocation2 + $0x140] sm:$0xf]
    %v134 = vld [vmem:[#allocation2 + $0x144] sm:$0xf]
    %v135 = vld [vmem:[#allocation2 + $0x148] sm:$0xf]
    %v136 = vld [vmem:[#allocation2 + $0x14c] sm:$0xf]
    %v137 = vld [vmem:[#allocation2 + $0x150] sm:$0xf]
    %v138 = vld [vmem:[#allocation2 + $0x154] sm:$0xf]
    %v139 = vld [vmem:[#allocation2 + $0x158] sm:$0xf]
    %v140 = vld [vmem:[#allocation2 + $0x15c] sm:$0xf]
    %v141 = vld [vmem:[#allocation2 + $0x160] sm:$0xf]
    %v142 = vld [vmem:[#allocation2 + $0x164] sm:$0xf]
    %v143 = vld [vmem:[#allocation2 + $0x168] sm:$0xf]
    %v144 = vld [vmem:[#allocation2 + $0x16c] sm:$0xf]
    %v145 = vld [vmem:[#allocation2 + $0x170] sm:$0xf]
    %v146 = vld [vmem:[#allocation2 + $0x174] sm:$0xf]
    %v147 = vld [vmem:[#allocation2 + $0x178] sm:$0xf]
    %v148 = vld [vmem:[#allocation2 + $0x17c] sm:$0xf]
    %v149 = vld [vmem:[#allocation2 + $0x180] sm:$0xf]
    %v150 = vld [vmem:[#allocation2 + $0x184] sm:$0xf]
    %v151 = vld [vmem:[%s2] sm:$0x1]
    %v153 = vlaneseq
    %v154 = vshrl.u32 %v153, 7
    %v155 = vsub.s32 0, %v154
    %v156 = vrot.slane %v151, %v155
    %v162 = vunpack.c.l.b16 %v49
    %v163 = vunpack.c.h.b16 %v49
    %v164 = vunpack.c.l.b16 %v50
    %v165 = vunpack.c.h.b16 %v50
    %v166 = vunpack.c.l.b16 %v51
    %v167 = vunpack.c.h.b16 %v51
    %v168 = vunpack.c.l.b16 %v52
    %v169 = vpack.c.b16 %v162, %v162
    %v170 = vpack.c.b16 %v163, %v163
    %v171 = vpack.c.b16 %v164, %v164
    %v172 = vpack.c.b16 %v165, %v165
    %v173 = vpack.c.b16 %v166, %v166
    %v174 = vpack.c.b16 %v167, %v167
    %v175 = vpack.c.b16 %v168, %v168
    %v280 = vunpack.c.l.b16 %v53
    %v281 = vunpack.c.l.b16 %v54
    %v282 = vunpack.c.l.b16 %v55
    %v283 = vunpack.c.l.b16 %v56
    %v284 = vunpack.c.l.b16 %v57
    %v285 = vunpack.c.l.b16 %v58
    %v286 = vunpack.c.l.b16 %v59
    %v287 = vunpack.c.l.b16 %v60
    %v288 = vunpack.c.l.b16 %v61
    %v289 = vunpack.c.l.b16 %v62
    %v290 = vunpack.c.l.b16 %v63
    %v291 = vunpack.c.l.b16 %v64
    %v292 = vunpack.c.l.b16 %v65
    %v293 = vunpack.c.l.b16 %v66
    %v294 = vunpack.c.l.b16 %v67
    %v295 = vunpack.c.l.b16 %v68
    %v296 = vunpack.c.l.b16 %v69
    %v297 = vunpack.c.l.b16 %v70
    %v298 = vunpack.c.l.b16 %v71
    %v299 = vunpack.c.l.b16 %v72
    %v300 = vunpack.c.l.b16 %v73
    %v301 = vunpack.c.l.b16 %v74
    %v302 = vunpack.c.l.b16 %v75
    %v303 = vunpack.c.l.b16 %v76
    %v304 = vunpack.c.l.b16 %v77
    %v305 = vunpack.c.l.b16 %v78
    %v306 = vunpack.c.l.b16 %v79
    %v307 = vunpack.c.l.b16 %v80
    %v308 = vunpack.c.l.b16 %v81
    %v309 = vunpack.c.l.b16 %v82
    %v310 = vunpack.c.l.b16 %v83
    %v311 = vunpack.c.l.b16 %v84
    %v312 = vunpack.c.l.b16 %v85
    %v313 = vunpack.c.l.b16 %v86
    %v314 = vunpack.c.l.b16 %v87
    %v315 = vunpack.c.l.b16 %v88
    %v316 = vunpack.c.l.b16 %v89
    %v317 = vunpack.c.l.b16 %v90
    %v318 = vunpack.c.l.b16 %v91
    %v319 = vunpack.c.l.b16 %v92
    %v320 = vunpack.c.l.b16 %v93
    %v321 = vunpack.c.l.b16 %v94
    %v322 = vunpack.c.l.b16 %v95
    %v323 = vunpack.c.l.b16 %v96
    %v324 = vunpack.c.l.b16 %v97
    %v325 = vunpack.c.l.b16 %v98
    %v326 = vunpack.c.l.b16 %v99
    %v327 = vunpack.c.l.b16 %v100
    %v328 = vunpack.c.l.b16 %v101
    %v329 = vunpack.c.l.b16 %v102
    %v330 = vunpack.c.l.b16 %v103
    %v331 = vunpack.c.l.b16 %v104
    %v332 = vunpack.c.l.b16 %v105
    %v333 = vunpack.c.l.b16 %v106
    %v334 = vunpack.c.l.b16 %v107
    %v335 = vunpack.c.l.b16 %v108
    %v336 = vunpack.c.l.b16 %v109
    %v337 = vunpack.c.l.b16 %v110
    %v338 = vunpack.c.l.b16 %v111
    %v339 = vunpack.c.l.b16 %v112
    %v340 = vunpack.c.l.b16 %v113
    %v341 = vunpack.c.l.b16 %v114
    %v342 = vunpack.c.l.b16 %v115
    %v343 = vunpack.c.l.b16 %v116
    %v344 = vunpack.c.l.b16 %v117
    %v345 = vunpack.c.l.b16 %v118
    %v346 = vunpack.c.l.b16 %v119
    %v347 = vunpack.c.l.b16 %v120
    %v348 = vunpack.c.l.b16 %v121
    %v349 = vunpack.c.l.b16 %v122
    %v350 = vunpack.c.l.b16 %v123
    %v351 = vunpack.c.l.b16 %v124
    %v352 = vunpack.c.l.b16 %v125
    %v353 = vunpack.c.l.b16 %v126
    %v354 = vunpack.c.l.b16 %v127
    %v355 = vunpack.c.l.b16 %v128
    %v356 = vunpack.c.l.b16 %v129
    %v357 = vunpack.c.l.b16 %v130
    %v358 = vunpack.c.l.b16 %v131
    %v359 = vunpack.c.l.b16 %v132
    %v360 = vunpack.c.l.b16 %v133
    %v361 = vunpack.c.l.b16 %v134
    %v362 = vunpack.c.l.b16 %v135
    %v363 = vunpack.c.l.b16 %v136
    %v364 = vunpack.c.l.b16 %v137
    %v365 = vunpack.c.l.b16 %v138
    %v366 = vunpack.c.l.b16 %v139
    %v367 = vunpack.c.l.b16 %v140
    %v368 = vunpack.c.l.b16 %v141
    %v369 = vunpack.c.l.b16 %v142
    %v370 = vunpack.c.l.b16 %v143
    %v371 = vunpack.c.l.b16 %v144
    %v372 = vunpack.c.l.b16 %v145
    %v373 = vunpack.c.l.b16 %v146
    %v374 = vunpack.c.l.b16 %v147
    %v375 = vunpack.c.l.b16 %v148
    %v376 = vunpack.c.l.b16 %v149
    %v377 = vunpack.c.l.b16 %v150
    %v378 = vpack.c.b16 %v281, %v280
    %v379 = vpack.c.b16 %v283, %v282
    %v380 = vpack.c.b16 %v285, %v284
    %v381 = vpack.c.b16 %v287, %v286
    %v382 = vpack.c.b16 %v289, %v288
    %v383 = vpack.c.b16 %v291, %v290
    %v384 = vpack.c.b16 %v293, %v292
    %v385 = vpack.c.b16 %v295, %v294
    %v386 = vpack.c.b16 %v297, %v296
    %v387 = vpack.c.b16 %v299, %v298
    %v388 = vpack.c.b16 %v301, %v300
    %v389 = vpack.c.b16 %v303, %v302
    %v390 = vpack.c.b16 %v305, %v304
    %v391 = vpack.c.b16 %v307, %v306
    %v392 = vpack.c.b16 %v309, %v308
    %v393 = vpack.c.b16 %v311, %v310
    %v394 = vpack.c.b16 %v313, %v312
    %v395 = vpack.c.b16 %v315, %v314
    %v396 = vpack.c.b16 %v317, %v316
    %v397 = vpack.c.b16 %v319, %v318
    %v398 = vpack.c.b16 %v321, %v320
    %v399 = vpack.c.b16 %v323, %v322
    %v400 = vpack.c.b16 %v325, %v324
    %v401 = vpack.c.b16 %v327, %v326
    %v402 = vpack.c.b16 %v329, %v328
    %v403 = vpack.c.b16 %v331, %v330
    %v404 = vpack.c.b16 %v333, %v332
    %v405 = vpack.c.b16 %v335, %v334
    %v406 = vpack.c.b16 %v337, %v336
    %v407 = vpack.c.b16 %v339, %v338
    %v408 = vpack.c.b16 %v341, %v340
    %v409 = vpack.c.b16 %v343, %v342
    %v410 = vpack.c.b16 %v345, %v344
    %v411 = vpack.c.b16 %v347, %v346
    %v412 = vpack.c.b16 %v349, %v348
    %v413 = vpack.c.b16 %v351, %v350
    %v414 = vpack.c.b16 %v353, %v352
    %v415 = vpack.c.b16 %v355, %v354
    %v416 = vpack.c.b16 %v357, %v356
    %v417 = vpack.c.b16 %v359, %v358
    %v418 = vpack.c.b16 %v361, %v360
    %v419 = vpack.c.b16 %v363, %v362
    %v420 = vpack.c.b16 %v365, %v364
    %v421 = vpack.c.b16 %v367, %v366
    %v422 = vpack.c.b16 %v369, %v368
    %v423 = vpack.c.b16 %v371, %v370
    %v424 = vpack.c.b16 %v373, %v372
    %v425 = vpack.c.b16 %v375, %v374
    %v426 = vpack.c.b16 %v377, %v376
    %vm476 = vcmask 130048
    %v478 = vsel %vm476, %v175, 0
    %480 = vmatprep.subr.bf16.mxu0 0
    %481 = vmatpush1.bf16.msra.mxu0 %v385
    %482 = vmatprep.subr.bf16.mxu0 0
    %483 = vmatpush1.bf16.msra.mxu0 %v384
    %484 = vmatprep.subr.bf16.mxu0 0
    %485 = vmatpush1.bf16.msra.mxu0 %v383
    %486 = vmatprep.subr.bf16.mxu0 0
    %487 = vmatpush1.bf16.msra.mxu0 %v382
    %488 = vmatprep.subr.bf16.mxu0 0
    %489 = vmatpush1.bf16.msra.mxu0 %v381
    %490 = vmatprep.subr.bf16.mxu0 0
    %491 = vmatpush1.bf16.msra.mxu0 %v380
    %492 = vmatprep.subr.bf16.mxu0 0
    %493 = vmatpush1.bf16.msra.mxu0 %v379
    %494 = vmatprep.subr.bf16.mxu0 0
    %495 = vmatpush1.bf16.msra.mxu0 %v378
    %496 = vmatprep.subr.bf16.mxu0 0
    %497 = vmatpush2.bf16.msra.mxu0 %v393
    %498 = vmatprep.subr.bf16.mxu0 0
    %499 = vmatpush2.bf16.msra.mxu0 %v392
    %500 = vmatprep.subr.bf16.mxu0 0
    %501 = vmatpush2.bf16.msra.mxu0 %v391
    %502 = vmatprep.subr.bf16.mxu0 0
    %503 = vmatpush2.bf16.msra.mxu0 %v390
    %504 = vmatprep.subr.bf16.mxu0 0
    %505 = vmatpush2.bf16.msra.mxu0 %v389
    %506 = vmatprep.subr.bf16.mxu0 0
    %507 = vmatpush2.bf16.msra.mxu0 %v388
    %508 = vmatprep.subr.bf16.mxu0 0
    %509 = vmatpush2.bf16.msra.mxu0 %v387
    %510 = vmatprep.subr.bf16.mxu0 0
    %511 = vmatpush2.bf16.msra.mxu0 %v386
    %512 = vmatprep.mubr.bf16.mxu0 %v170
    %513 = vmatmul.mubr.bf16.gmra.mxu0 %v169
    %v514 = vpop.f32.mrf.mxu0
    %v515 = vadd.f32 %v156, %v514
    %v516 = vpop.f32.mrf.mxu0
    %v517 = vpop.f32.mrf.mxu0
    %v518 = vpop.f32.mrf.mxu0
    %519 = vdwg.mxu0
    %520 = vmatprep.subr.bf16.mxu0 0
    %521 = vmatpush1.bf16.msra.mxu0 %v401
    %522 = vmatprep.subr.bf16.mxu0 0
    %523 = vmatpush1.bf16.msra.mxu0 %v400
    %524 = vmatprep.subr.bf16.mxu0 0
    %525 = vmatpush1.bf16.msra.mxu0 %v399
    %526 = vmatprep.subr.bf16.mxu0 0
    %527 = vmatpush1.bf16.msra.mxu0 %v398
    %528 = vmatprep.subr.bf16.mxu0 0
    %529 = vmatpush1.bf16.msra.mxu0 %v397
    %530 = vmatprep.subr.bf16.mxu0 0
    %531 = vmatpush1.bf16.msra.mxu0 %v396
    %532 = vmatprep.subr.bf16.mxu0 0
    %533 = vmatpush1.bf16.msra.mxu0 %v395
    %534 = vmatprep.subr.bf16.mxu0 0
    %535 = vmatpush1.bf16.msra.mxu0 %v394
    %536 = vmatprep.subr.bf16.mxu0 0
    %537 = vmatpush2.bf16.msra.mxu0 %v409
    %538 = vmatprep.subr.bf16.mxu0 0
    %539 = vmatpush2.bf16.msra.mxu0 %v408
    %540 = vmatprep.subr.bf16.mxu0 0
    %541 = vmatpush2.bf16.msra.mxu0 %v407
    %542 = vmatprep.subr.bf16.mxu0 0
    %543 = vmatpush2.bf16.msra.mxu0 %v406
    %544 = vmatprep.subr.bf16.mxu0 0
    %545 = vmatpush2.bf16.msra.mxu0 %v405
    %546 = vmatprep.subr.bf16.mxu0 0
    %547 = vmatpush2.bf16.msra.mxu0 %v404
    %548 = vmatprep.subr.bf16.mxu0 0
    %549 = vmatpush2.bf16.msra.mxu0 %v403
    %550 = vmatprep.subr.bf16.mxu0 0
    %551 = vmatpush2.bf16.msra.mxu0 %v402
    %552 = vmatprep.mubr.bf16.mxu0 %v172
    %553 = vmatmul.mubr.bf16.gmra.mxu0 %v171
    %v554 = vpop.f32.mrf.mxu0
    %v555 = vadd.f32 %v515, %v554
    %v556 = vpop.f32.mrf.mxu0
    %v557 = vpop.f32.mrf.mxu0
    %v558 = vpop.f32.mrf.mxu0
    %559 = vdwg.mxu0
    %560 = vmatprep.subr.bf16.mxu0 0
    %561 = vmatpush1.bf16.msra.mxu0 %v417
    %562 = vmatprep.subr.bf16.mxu0 0
    %563 = vmatpush1.bf16.msra.mxu0 %v416
    %564 = vmatprep.subr.bf16.mxu0 0
    %565 = vmatpush1.bf16.msra.mxu0 %v415
    %566 = vmatprep.subr.bf16.mxu0 0
    %567 = vmatpush1.bf16.msra.mxu0 %v414
    %568 = vmatprep.subr.bf16.mxu0 0
    %569 = vmatpush1.bf16.msra.mxu0 %v413
    %570 = vmatprep.subr.bf16.mxu0 0
    %571 = vmatpush1.bf16.msra.mxu0 %v412
    %572 = vmatprep.subr.bf16.mxu0 0
    %573 = vmatpush1.bf16.msra.mxu0 %v411
    %574 = vmatprep.subr.bf16.mxu0 0
    %575 = vmatpush1.bf16.msra.mxu0 %v410
    %576 = vmatprep.subr.bf16.mxu0 0
    %577 = vmatpush2.bf16.msra.mxu0 %v425
    %578 = vmatprep.subr.bf16.mxu0 0
    %579 = vmatpush2.bf16.msra.mxu0 %v424
    %580 = vmatprep.subr.bf16.mxu0 0
    %581 = vmatpush2.bf16.msra.mxu0 %v423
    %582 = vmatprep.subr.bf16.mxu0 0
    %583 = vmatpush2.bf16.msra.mxu0 %v422
    %584 = vmatprep.subr.bf16.mxu0 0
    %585 = vmatpush2.bf16.msra.mxu0 %v421
    %586 = vmatprep.subr.bf16.mxu0 0
    %587 = vmatpush2.bf16.msra.mxu0 %v420
    %588 = vmatprep.subr.bf16.mxu0 0
    %589 = vmatpush2.bf16.msra.mxu0 %v419
    %590 = vmatprep.subr.bf16.mxu0 0
    %591 = vmatpush2.bf16.msra.mxu0 %v418
    %592 = vmatprep.mubr.bf16.mxu0 %v174
    %593 = vmatmul.mubr.bf16.gmra.mxu0 %v173
    %v594 = vpop.f32.mrf.mxu0
    %v595 = vadd.f32 %v555, %v594
    %v596 = vpop.f32.mrf.mxu0
    %v597 = vpop.f32.mrf.mxu0
    %v598 = vpop.f32.mrf.mxu0
    %599 = vdwg.mxu0
    %600 = vmatprep.subr.bf16.mxu0 0
    %601 = vmatpush1.bf16.msra.mxu0 0
    %602 = vmatprep.subr.bf16.mxu0 0
    %603 = vmatpush1.bf16.msra.mxu0 0
    %604 = vmatprep.subr.bf16.mxu0 0
    %605 = vmatpush1.bf16.msra.mxu0 0
    %606 = vmatprep.subr.bf16.mxu0 0
    %607 = vmatpush1.bf16.msra.mxu0 0
    %608 = vmatprep.subr.bf16.mxu0 0
    %609 = vmatpush1.bf16.msra.mxu0 0
    %610 = vmatprep.subr.bf16.mxu0 0
    %611 = vmatpush1.bf16.msra.mxu0 0
    %612 = vmatprep.subr.bf16.mxu0 0
    %613 = vmatpush1.bf16.msra.mxu0 0
    %614 = vmatprep.subr.bf16.mxu0 0
    %615 = vmatpush1.bf16.msra.mxu0 %v426
    %616 = vmatprep.subr.bf16.mxu0 0
    %617 = vmatpush2.bf16.msra.mxu0 0
    %618 = vmatprep.subr.bf16.mxu0 0
    %619 = vmatpush2.bf16.msra.mxu0 0
    %620 = vmatprep.subr.bf16.mxu0 0
    %621 = vmatpush2.bf16.msra.mxu0 0
    %622 = vmatprep.subr.bf16.mxu0 0
    %623 = vmatpush2.bf16.msra.mxu0 0
    %624 = vmatprep.subr.bf16.mxu0 0
    %625 = vmatpush2.bf16.msra.mxu0 0
    %626 = vmatprep.subr.bf16.mxu0 0
    %627 = vmatpush2.bf16.msra.mxu0 0
    %628 = vmatprep.subr.bf16.mxu0 0
    %629 = vmatpush2.bf16.msra.mxu0 0
    %630 = vmatprep.subr.bf16.mxu0 0
    %631 = vmatpush2.bf16.msra.mxu0 0
    %632 = vmatprep.mubr.bf16.mxu0 0
    %633 = vmatmul.mubr.bf16.gmra.mxu0 %v478
    %v634 = vpop.f32.mrf.mxu0
    %v635 = vadd.f32 %v595, %v634
    %v636 = vpop.f32.mrf.mxu0
    %v637 = vpop.f32.mrf.mxu0
    %v638 = vpop.f32.mrf.mxu0
    %639 = vdwg.mxu0
    %v640 = vmax.f32 %v635, 0.0
    %v641 = vpack.c.bf16 %v640, %v640
    %v642 = vld [vmem:[#allocation4] sm:$0xf]
    %v643 = vld [vmem:[#allocation4 + $0x4] sm:$0xf]
    %v644 = vld [vmem:[#allocation4 + $0x8] sm:$0xf]
    %v645 = vld [vmem:[#allocation4 + $0xc] sm:$0xf]
    %v646 = vld [vmem:[#allocation4 + $0x10] sm:$0xf]
    %v647 = vld [vmem:[#allocation4 + $0x14] sm:$0xf]
    %v648 = vld [vmem:[#allocation4 + $0x18] sm:$0xf]
    %v649 = vld [vmem:[#allocation4 + $0x1c] sm:$0xf]
    %v650 = vld [vmem:[#allocation4 + $0x20] sm:$0xf]
    %v651 = vld [vmem:[#allocation4 + $0x24] sm:$0xf]
    %v652 = vld [vmem:[#allocation4 + $0x28] sm:$0xf]
    %v653 = vld [vmem:[#allocation4 + $0x2c] sm:$0xf]
    %v654 = vld [vmem:[#allocation4 + $0x30] sm:$0xf]
    %v655 = vld [vmem:[#allocation4 + $0x34] sm:$0xf]
    %v656 = vld [vmem:[#allocation4 + $0x38] sm:$0xf]
    %v657 = vld [vmem:[#allocation4 + $0x3c] sm:$0xf]
    %v658 = vld [vmem:[%s4] sm:$0x1]
    %v660 = vlaneseq
    %v661 = vshrl.u32 %v660, 7
    %v662 = vsub.s32 0, %v661
    %v663 = vrot.slane %v658, %v662
    %v681 = vunpack.c.l.b16 %v642
    %v682 = vunpack.c.l.b16 %v643
    %v683 = vunpack.c.l.b16 %v644
    %v684 = vunpack.c.l.b16 %v645
    %v685 = vunpack.c.l.b16 %v646
    %v686 = vunpack.c.l.b16 %v647
    %v687 = vunpack.c.l.b16 %v648
    %v688 = vunpack.c.l.b16 %v649
    %v689 = vunpack.c.l.b16 %v650
    %v690 = vunpack.c.l.b16 %v651
    %v691 = vunpack.c.l.b16 %v652
    %v692 = vunpack.c.l.b16 %v653
    %v693 = vunpack.c.l.b16 %v654
    %v694 = vunpack.c.l.b16 %v655
    %v695 = vunpack.c.l.b16 %v656
    %v696 = vunpack.c.l.b16 %v657
    %v697 = vpack.c.b16 %v682, %v681
    %v698 = vpack.c.b16 %v684, %v683
    %v699 = vpack.c.b16 %v686, %v685
    %v700 = vpack.c.b16 %v688, %v687
    %v701 = vpack.c.b16 %v690, %v689
    %v702 = vpack.c.b16 %v692, %v691
    %v703 = vpack.c.b16 %v694, %v693
    %v704 = vpack.c.b16 %v696, %v695
    %713 = vmatprep.subr.bf16.mxu0 0
    %714 = vmatpush1.bf16.msra.mxu0 %v704
    %715 = vmatprep.subr.bf16.mxu0 0
    %716 = vmatpush1.bf16.msra.mxu0 %v703
    %717 = vmatprep.subr.bf16.mxu0 0
    %718 = vmatpush1.bf16.msra.mxu0 %v702
    %719 = vmatprep.subr.bf16.mxu0 0
    %720 = vmatpush1.bf16.msra.mxu0 %v701
    %721 = vmatprep.subr.bf16.mxu0 0
    %722 = vmatpush1.bf16.msra.mxu0 %v700
    %723 = vmatprep.subr.bf16.mxu0 0
    %724 = vmatpush1.bf16.msra.mxu0 %v699
    %725 = vmatprep.subr.bf16.mxu0 0
    %726 = vmatpush1.bf16.msra.mxu0 %v698
    %727 = vmatprep.subr.bf16.mxu0 0
    %728 = vmatpush1.bf16.msra.mxu0 %v697
    %729 = vmatprep.subr.bf16.mxu0 0
    %730 = vmatpush2.bf16.msra.mxu0 0
    %731 = vmatprep.subr.bf16.mxu0 0
    %732 = vmatpush2.bf16.msra.mxu0 0
    %733 = vmatprep.subr.bf16.mxu0 0
    %734 = vmatpush2.bf16.msra.mxu0 0
    %735 = vmatprep.subr.bf16.mxu0 0
    %736 = vmatpush2.bf16.msra.mxu0 0
    %737 = vmatprep.subr.bf16.mxu0 0
    %738 = vmatpush2.bf16.msra.mxu0 0
    %739 = vmatprep.subr.bf16.mxu0 0
    %740 = vmatpush2.bf16.msra.mxu0 0
    %741 = vmatprep.subr.bf16.mxu0 0
    %742 = vmatpush2.bf16.msra.mxu0 0
    %743 = vmatprep.subr.bf16.mxu0 0
    %744 = vmatpush2.bf16.msra.mxu0 0
    %745 = vmatprep.mubr.bf16.mxu0 0
    %746 = vmatmul.mubr.bf16.gmra.mxu0 %v641
    %v747 = vpop.f32.mrf.mxu0
    %v748 = vadd.f32 %v663, %v747
    %v749 = vpop.f32.mrf.mxu0
    %v750 = vpop.f32.mrf.mxu0
    %v751 = vpop.f32.mrf.mxu0
    %752 = vdwg.mxu0
    %753 = vst [vmem:[%s5] sm:$0xff] %v748
    // Predicated region
    $region30: #{mlp_forward_pallas.1} parent=1 // pred_check
      _
    $region31: #{mlp_forward_pallas.1} parent=1 // pred_check_branch
      %755 = sbr.rel (0) target = $region33
    $region32: #{mlp_forward_pallas.1} parent=1 // pred_region
      _
    $region33: #{mlp_forward_pallas.1} parent=1 // pred_fallthru
      _
    // Predicated region
    $region34: #{mlp_forward_pallas.1} parent=1 // pred_check
      _
    $region35: #{mlp_forward_pallas.1} parent=1 // pred_check_branch
      %757 = sbr.rel (0) target = $region37
    $region36: #{mlp_forward_pallas.1} parent=1 // pred_region
      _
    $region37: #{mlp_forward_pallas.1} parent=1 // pred_fallthru
      _
    %758 = vsyncpa [#allocation3], 1
    %759 = vsyncpa [#allocation5], 1

</llo_original>
